<compile_context>
chip_gen: v7x
topology: tpu7x:2x2x1
jax: 0.10.0
libtpu: 0.0.40
codegen_flags: <defaults>
</compile_context>

<pallas_src>
import functools
import math

import jax
import jax.numpy as jnp
from jax.experimental import pallas as pl
from jax.experimental.pallas import tpu as pltpu

_INV_SQRT2 = 1.0 / math.sqrt(2.0)


# ----------------------------------------------------------------------------
# Kernel
# ----------------------------------------------------------------------------
def _mlp_kernel(x_ref, w1_ref, b1_ref, w2_ref, b2_ref, o_ref):
    """Grid step (row-tile i, hidden-tile j) of GELU(x @ w1 + b1) @ w2 + b2.

    h        = GELU(x_tile @ w1[:, j-th slab] + b1[j-th slab])   (f32 math)
    o (f32) += h @ w2[j-th slab, :]        (b2 folded into the j==0 initialization)
    """
    j = pl.program_id(1)

    # First matmul: bf16 operands, f32 accumulation on the MXU.
    h = jnp.dot(x_ref[...], w1_ref[...], preferred_element_type=jnp.float32)
    h = h + b1_ref[...]
    # Exact erf GELU (torch.nn.GELU default), computed in f32.
    h = 0.5 * h * (1.0 + jax.lax.erf(h * _INV_SQRT2))
    # Second matmul partial product for this hidden slab.
    partial = jnp.dot(
        h.astype(w2_ref.dtype), w2_ref[...], preferred_element_type=jnp.float32
    )

    @pl.when(j == 0)
    def _():
        o_ref[...] = partial + b2_ref[...]

    @pl.when(j > 0)
    def _():
        o_ref[...] += partial


# ----------------------------------------------------------------------------
# Per-chip configuration & tile selection
# ----------------------------------------------------------------------------
def _round_up(x, m):
    return ((x + m - 1) // m) * m


def _cdiv(a, b):
    return -(-a // b)


def _chip_config():
    """Return (target row tile, vmem_limit_bytes, dual_core) for the local TPU."""
    kind = ""
    try:
        kind = jax.devices()[0].device_kind.lower()
    except Exception:
        pass
    is_v7 = ("v7" in kind) or ("7x" in kind)
    is_v6 = "v6" in kind

    vmem_cap = 0
    try:
        vmem_cap = int(getattr(pltpu.get_tpu_info(), "vmem_capacity_bytes"))
    except Exception:
        vmem_cap = 0
    if vmem_cap <= 0:
        # Conservative fallback when the generation is unknown.
        vmem_cap = (128 if (kind and not is_v7) else 64) * 1024 * 1024
    if is_v7:
        vmem_cap = min(vmem_cap, 64 * 1024 * 1024)  # 64 MiB per TC on v7x

    # Leave headroom for Mosaic internal scratch: ~48 MiB on v7x, ~102 MiB on v5e/v6e.
    vmem_limit = max(
        32 * 1024 * 1024, min(vmem_cap - 16 * 1024 * 1024, int(vmem_cap * 0.8))
    )

    # Weight-streaming ridge: ~310 FLOPs/byte (v7x), ~650 (v6e), ~240 (v5e).
    target_tm = 1024 if is_v6 else 512
    return target_tm, vmem_limit, is_v7


def _footprint_bytes(tm, th, emb):
    x_b = 2 * tm * emb * 2                 # bf16 row tile, double-buffered
    o_b = 2 * tm * emb * 4                 # f32 output/accumulator tile, double-buffered
    w_b = 2 * (emb * th + th * emb) * 2    # bf16 w1 + w2 slabs, double-buffered
    bias = 2 * (th + emb) * 4
    return x_b + o_b + w_b + bias


def _hidden_tile_candidates(hid):
    cands = [hid]                          # full hidden dim => weights resident on-chip
    if hid % 128 == 0:
        t = hid - 128
        while t >= 128:
            if hid % t == 0:
                cands.append(t)
            t -= 128
    return cands


def _choose_tiles(n, emb, hid, target_tm, vmem_limit, dual_core):
    # Row tile: 256-aligned (MXU-sized); tiny batches get a single 16-aligned tile.
    if n <= 128:
        tm = _round_up(max(n, 8), 16)
    else:
        tm = max(256, (min(target_tm, _round_up(n, 256)) // 256) * 256)
        if dual_core:
            n_tiles = _cdiv(n, tm)
            if n_tiles > 1 and n_tiles % 2 == 1:
                # Even row-tile count keeps both v7x TensorCores busy, but never drop
                # below 512 rows (per-TC weight-streaming ridge).
                for cand in range(tm - 256, 511, -256):
                    if _cdiv(n, cand) % 2 == 0:
                        tm = cand
                        break

    budget = vmem_limit - 2 * 1024 * 1024
    cands = _hidden_tile_candidates(hid)
    while True:
        for th in cands:                   # descending: prefer fully resident weights
            if _footprint_bytes(tm, th, emb) <= budget:
                return tm, th
        if tm <= 256:
            return tm, cands[-1]           # best effort for extreme emb sizes
        tm -= 256


# ----------------------------------------------------------------------------
# Wrapper
# ----------------------------------------------------------------------------
def mlp_forward(x, w1, b1, w2, b2, *, tm=None, th=None, interpret=False):
    """Fused MLP forward: GELU(x @ w1 + b1) @ w2 + b2, any leading dims on x."""
    orig_shape = x.shape
    emb = orig_shape[-1]
    hid = w1.shape[1]
    x2 = x.reshape(-1, emb)
    n = x2.shape[0]

    target_tm, vmem_limit, dual_core = _chip_config()
    auto_tm, auto_th = _choose_tiles(n, emb, hid, target_tm, vmem_limit, dual_core)
    tm = auto_tm if tm is None else tm
    th = auto_th if th is None else th
    assert hid % th == 0, f"hidden tile {th} must divide {hid}"

    # Ragged n: zero-pad rows up to a tile multiple (sliced off below).
    n_pad = _round_up(n, tm)
    if n_pad != n:
        x2 = jnp.pad(x2, ((0, n_pad - n), (0, 0)))

    kern = pl.pallas_call(
        _mlp_kernel,
        out_shape=jax.ShapeDtypeStruct((n_pad, emb), jnp.float32),
        grid=(n_pad // tm, hid // th),                      # reduction axis last
        in_specs=[
            pl.BlockSpec((tm, emb), lambda i, j: (i, 0)),   # x rows (resident over j)
            pl.BlockSpec((emb, th), lambda i, j: (0, j)),   # w1 column slab
            pl.BlockSpec((1, th), lambda i, j: (0, j)),     # b1 slab (f32)
            pl.BlockSpec((th, emb), lambda i, j: (j, 0)),   # w2 row slab
            pl.BlockSpec((1, emb), lambda i, j: (0, 0)),    # b2 (f32)
        ],
        out_specs=pl.BlockSpec((tm, emb), lambda i, j: (i, 0)),
        compiler_params=pltpu.CompilerParams(
            dimension_semantics=("parallel", "arbitrary"),
            vmem_limit_bytes=vmem_limit,
        ),
        interpret=interpret,
    )
    out = kern(
        x2.astype(jnp.bfloat16),
        w1.astype(jnp.bfloat16),   # no-op when parameters are stored bf16
        b1.reshape(1, hid).astype(jnp.float32),
        w2.astype(jnp.bfloat16),
        b2.reshape(1, emb).astype(jnp.float32),
    )
    if n_pad != n:
        out = out[:n]
    return out.reshape(orig_shape).astype(x.dtype)


# ----------------------------------------------------------------------------
# Pure-JAX reference (matches the PyTorch module's f32 numerics)
# ----------------------------------------------------------------------------
def _mlp_ref(x2d, w1, b1, w2, b2):
    h = x2d @ w1 + b1
    h = 0.5 * h * (1.0 + jax.lax.erf(h * _INV_SQRT2))
    return h @ w2 + b2


if __name__ == "__main__":
    # Small shapes consistent with the module (default emb_size=64, 4x hidden).
    B, L, EMB = 2, 64, 64
    HID = 4 * EMB

    key = jax.random.PRNGKey(0)
    kx, k1, kb1, k2, kb2 = jax.random.split(key, 5)
    x = jax.random.normal(kx, (B, L, EMB), dtype=jnp.float32)
    w1 = 0.02 * jax.random.normal(k1, (EMB, HID), dtype=jnp.float32)
    b1 = 0.01 * jax.random.normal(kb1, (HID,), dtype=jnp.float32)
    w2 = 0.02 * jax.random.normal(k2, (HID, EMB), dtype=jnp.float32)
    b2 = 0.01 * jax.random.normal(kb2, (EMB,), dtype=jnp.float32)

    # Store parameters as bf16 persistently: no per-call f32->bf16 weight copies.
    w1_bf, w2_bf = w1.astype(jnp.bfloat16), w2.astype(jnp.bfloat16)

    ref = _mlp_ref(x.reshape(-1, EMB), w1, b1, w2, b2).reshape(B, L, EMB)

    # 1) Auto-config path (weights fully resident, single hidden step).
    fwd_auto = jax.jit(mlp_forward)
    out = fwd_auto(x, w1_bf, b1, w2_bf, b2)
    jax.block_until_ready(out)
    assert out.shape == (B, L, EMB), out.shape
    assert bool(jnp.all(jnp.isfinite(out)))
    err = float(jnp.max(jnp.abs(out - ref)))
    assert err < 5e-2, f"auto path max |err| = {err}"  # bf16-operand tolerance

    # 2) Multi-step hidden accumulation path (th override forces 2 reduction steps).
    fwd_acc = jax.jit(functools.partial(mlp_forward, th=128))
    out2 = fwd_acc(x, w1_bf, b1, w2_bf, b2)
    jax.block_until_ready(out2)
    err2 = float(jnp.max(jnp.abs(out2 - ref)))
    assert err2 < 5e-2, f"accumulation path max |err| = {err2}"

    # 3) Ragged row count (exercises the zero-padding path).
    xr = jax.random.normal(kx, (3, 5, EMB), dtype=jnp.float32)
    out3 = jax.jit(mlp_forward)(xr, w1_bf, b1, w2_bf, b2)
    jax.block_until_ready(out3)
    ref3 = _mlp_ref(xr.reshape(-1, EMB), w1, b1, w2, b2).reshape(3, 5, EMB)
    err3 = float(jnp.max(jnp.abs(out3 - ref3)))
    assert err3 < 5e-2, f"ragged path max |err| = {err3}"

    print("KERNEL_OK")
</pallas_src>

<mosaic_0001>
module attributes {stable_mosaic.version = 11 : i64} {
  func.func @_mlp_kernel(%arg0: i32, %arg1: i32, %arg2: memref<128x64xbf16, #tpu.memory_space<vmem>>, %arg3: memref<64x256xbf16, #tpu.memory_space<vmem>>, %arg4: memref<1x256xf32, #tpu.memory_space<vmem>>, %arg5: memref<256x64xbf16, #tpu.memory_space<vmem>>, %arg6: memref<1x64xf32, #tpu.memory_space<vmem>>, %arg7: memref<128x64xf32, #tpu.memory_space<vmem>>) attributes {dimension_semantics = [#tpu.dimension_semantics<parallel>, #tpu.dimension_semantics<arbitrary>], iteration_bounds = array<i64: 1, 1>, scalar_prefetch = 0 : i64, scratch_operands = 0 : i64, tpu.core_type = #tpu.core_type<tc>, window_params = [{transform_indices = @transform_0, window_bounds = array<i64: 128, 64>}, {transform_indices = @transform_1, window_bounds = array<i64: 64, 256>}, {transform_indices = @transform_2, window_bounds = array<i64: 1, 256>}, {transform_indices = @transform_3, window_bounds = array<i64: 256, 64>}, {pipeline_mode = #tpu.pipeline_mode<synchronous>, transform_indices = @transform_4, window_bounds = array<i64: 1, 64>}, {transform_indices = @transform_5, window_bounds = array<i64: 128, 64>}]} {
    %c0 = arith.constant 0 : index
    %c0_0 = arith.constant 0 : index
    %0 = vector.load %arg2[%c0, %c0_0] : memref<128x64xbf16, #tpu.memory_space<vmem>>, vector<128x64xbf16>
    %c0_1 = arith.constant 0 : index
    %c0_2 = arith.constant 0 : index
    %1 = vector.load %arg3[%c0_1, %c0_2] : memref<64x256xbf16, #tpu.memory_space<vmem>>, vector<64x256xbf16>
    %cst = arith.constant dense<0.000000e+00> : vector<128x256xf32>
    %2 = tpu.matmul %0, %1, %cst {dimension_numbers = #tpu.dot_dimension_numbers<[1], [0], [0], [1], [0, 0, 1, 1], [], []>} : vector<128x64xbf16>, vector<64x256xbf16>, vector<128x256xf32> -> vector<128x256xf32>
    %c0_3 = arith.constant 0 : index
    %c0_4 = arith.constant 0 : index
    %3 = vector.load %arg4[%c0_3, %c0_4] : memref<1x256xf32, #tpu.memory_space<vmem>>, vector<1x256xf32>
    %4 = vector.broadcast %3 : vector<1x256xf32> to vector<128x256xf32>
    %5 = arith.addf %2, %4 : vector<128x256xf32>
    %cst_5 = arith.constant 5.000000e-01 : f32
    %6 = vector.broadcast %cst_5 : f32 to vector<128x256xf32>
    %7 = arith.mulf %6, %5 : vector<128x256xf32>
    %cst_6 = arith.constant 0.707106769 : f32
    %8 = vector.broadcast %cst_6 : f32 to vector<128x256xf32>
    %9 = arith.mulf %5, %8 : vector<128x256xf32>
    %10 = math.erf %9 : vector<128x256xf32>
    %cst_7 = arith.constant 1.000000e+00 : f32
    %11 = vector.broadcast %cst_7 : f32 to vector<128x256xf32>
    %12 = arith.addf %11, %10 : vector<128x256xf32>
    %13 = arith.mulf %7, %12 : vector<128x256xf32>
    %14 = arith.truncf %13 : vector<128x256xf32> to vector<128x256xbf16>
    %c0_8 = arith.constant 0 : index
    %c0_9 = arith.constant 0 : index
    %15 = vector.load %arg5[%c0_8, %c0_9] : memref<256x64xbf16, #tpu.memory_space<vmem>>, vector<256x64xbf16>
    %cst_10 = arith.constant dense<0.000000e+00> : vector<128x64xf32>
    %16 = tpu.matmul %14, %15, %cst_10 {dimension_numbers = #tpu.dot_dimension_numbers<[1], [0], [0], [1], [0, 0, 1, 1], [], []>} : vector<128x256xbf16>, vector<256x64xbf16>, vector<128x64xf32> -> vector<128x64xf32>
    %c0_i32 = arith.constant 0 : i32
    %17 = arith.cmpi eq, %arg1, %c0_i32 : i32
    %18 = arith.extui %17 : i1 to i32
    %c0_i32_11 = arith.constant 0 : i32
    %19 = arith.cmpi ne, %18, %c0_i32_11 : i32
    scf.if %19 {
      %c0_14 = arith.constant 0 : index
      %c0_15 = arith.constant 0 : index
      %23 = vector.load %arg6[%c0_14, %c0_15] : memref<1x64xf32, #tpu.memory_space<vmem>>, vector<1x64xf32>
      %24 = vector.broadcast %23 : vector<1x64xf32> to vector<128x64xf32>
      %25 = arith.addf %16, %24 : vector<128x64xf32>
      %c0_16 = arith.constant 0 : index
      %c0_17 = arith.constant 0 : index
      %26 = vector.load %arg7[%c0_16, %c0_17] : memref<128x64xf32, #tpu.memory_space<vmem>>, vector<128x64xf32>
      tpu.vector_store %arg7[%c0_16, %c0_17], %25 {strides = array<i32>} : memref<128x64xf32, #tpu.memory_space<vmem>>, vector<128x64xf32>,
    } else {
    }
    %c0_i32_12 = arith.constant 0 : i32
    %20 = arith.cmpi sgt, %arg1, %c0_i32_12 : i32
    %21 = arith.extui %20 : i1 to i32
    %c0_i32_13 = arith.constant 0 : i32
    %22 = arith.cmpi ne, %21, %c0_i32_13 : i32
    scf.if %22 {
      %c0_14 = arith.constant 0 : index
      %c0_15 = arith.constant 0 : index
      %23 = vector.load %arg7[%c0_14, %c0_15] : memref<128x64xf32, #tpu.memory_space<vmem>>, vector<128x64xf32>
      %24 = arith.addf %23, %16 : vector<128x64xf32>
      %c0_16 = arith.constant 0 : index
      %c0_17 = arith.constant 0 : index
      %25 = vector.load %arg7[%c0_16, %c0_17] : memref<128x64xf32, #tpu.memory_space<vmem>>, vector<128x64xf32>
      tpu.vector_store %arg7[%c0_16, %c0_17], %24 {strides = array<i32>} : memref<128x64xf32, #tpu.memory_space<vmem>>, vector<128x64xf32>,
    } else {
    }
    return
  }
  func.func @transform_0(%arg0: i32, %arg1: i32) -> (i32, i32) {
    %c0_i32 = arith.constant 0 : i32
    %c0_i32_0 = arith.constant 0 : i32
    return %arg0, %c0_i32 : i32, i32
  }
  func.func @transform_1(%arg0: i32, %arg1: i32) -> (i32, i32) {
    %c0_i32 = arith.constant 0 : i32
    %c0_i32_0 = arith.constant 0 : i32
    return %c0_i32, %arg1 : i32, i32
  }
  func.func @transform_2(%arg0: i32, %arg1: i32) -> (i32, i32) {
    %c0_i32 = arith.constant 0 : i32
    %c0_i32_0 = arith.constant 0 : i32
    return %c0_i32, %arg1 : i32, i32
  }
  func.func @transform_3(%arg0: i32, %arg1: i32) -> (i32, i32) {
    %c0_i32 = arith.constant 0 : i32
    %c0_i32_0 = arith.constant 0 : i32
    return %arg1, %c0_i32 : i32, i32
  }
  func.func @transform_4(%arg0: i32, %arg1: i32) -> (i32, i32) {
    %c0_i32 = arith.constant 0 : i32
    %c0_i32_0 = arith.constant 0 : i32
    %c0_i32_1 = arith.constant 0 : i32
    return %c0_i32, %c0_i32_0 : i32, i32
  }
  func.func @transform_5(%arg0: i32, %arg1: i32) -> (i32, i32) {
    %c0_i32 = arith.constant 0 : i32
    %c0_i32_0 = arith.constant 0 : i32
    return %arg0, %c0_i32 : i32, i32
  }
}

</mosaic_0001>

<llo_original>
// kernel: mlp_forward.1
$region0: #{mlp_forward.1}
  #allocation0 [shape = 'u32[]', space=smem, size = 0x4, offset = 0x4, fixed_abs, tag = 'smem constant byte address 0x4 - core index']
  #allocation1 [shape = 'u32[144,128]{1,0:T(1,128)}', space=vmem, size = 0x12000, scoped, tag = 'internal scratch']
  %s0 = inlined_call_operand.hbm [shape: bf16[128,64], index: 0, kind: input, shape index: {}]
  %s1 = inlined_call_operand.hbm [shape: bf16[64,256], index: 1, kind: input, shape index: {}]
  %s2 = inlined_call_operand.hbm [shape: f32[1,256], index: 2, kind: input, shape index: {}]
  %s3 = inlined_call_operand.hbm [shape: bf16[256,64], index: 3, kind: input, shape index: {}]
  %s4 = inlined_call_operand.hbm [shape: f32[1,64], index: 4, kind: input, shape index: {}]
  %s5 = inlined_call_operand.hbm [shape: f32[128,64], index: 5, kind: output, shape index: {}]
  %s6 = sld [smem:[#allocation0]]
  $region58: #{mlp_forward.1} parent=0
    _
  %s8 = ssub.s32 1, %s6
  %s9 = scalar_select 0, %s8, %s6
  $region1: #{mlp_forward.1} parent=0
    #allocation2 [shape = 'u8[32768]{0}', space=vmem, size = 0x8000, scoped, tag = 'input window, operand 0, single buffered']
    #allocation3 [shape = 's32[1]{0}', space=sflag, size = 0x4, scoped, tag = 'scoped memory for mlp_forward.1']
    #allocation4 [shape = 's32[1]{0}', space=sflag, size = 0x4, scoped, tag = 'scoped memory for mlp_forward.1']
    #allocation5 [shape = 'u8[32768]{0}', space=vmem, size = 0x8000, scoped, tag = 'input window, operand 1, single buffered']
    #allocation6 [shape = 's32[1]{0}', space=sflag, size = 0x4, scoped, tag = 'scoped memory for mlp_forward.1']
    #allocation7 [shape = 'u8[1024]{0}', space=vmem, size = 0x400, scoped, tag = 'input window, operand 2, single buffered']
    #allocation8 [shape = 'u8[65536]{0}', space=vmem, size = 0x10000, scoped, tag = 'input window, operand 3, single buffered']
    #allocation9 [shape = 's32[1]{0}', space=sflag, size = 0x4, scoped, tag = 'scoped memory for mlp_forward.1']
    #allocation10 [shape = 'u8[512]{0}', space=vmem, size = 0x400, scoped, tag = 'input window, operand 4, single buffered']
    #allocation11 [shape = 'u8[65536]{0}', space=vmem, size = 0x10000, scoped, tag = 'output window, operand 0, single buffered']
    %10 = vsyncpa [#allocation3], 0
    %11 = vsyncpa [#allocation6], 0
    %12 = vsyncpa [#allocation9], 0
    %13 = vsyncpa [#allocation4], 0
    // Predicated region
    $region2: #{mlp_forward.1} parent=1 // pred_check
      _
    $region3: #{mlp_forward.1} parent=1 // pred_check_branch
      %15 = sbr.rel (0) target = $region5
    $region4: #{mlp_forward.1} parent=1 // pred_region
      %s17 = ssub.s32 1024, 1024
      %18 = vsyncadd [#allocation3], %s17
      %s19 = sshll.u32 [#allocation2], 4
      %s20 = int_to_ptr.vmem [resolvable:$true] %s19
      %25 = dma.hbm_to_vmem [thread:$0]  %s0, 1024, %s20, [#allocation3], 64, 64, 4
    $region5: #{mlp_forward.1} parent=1 // pred_fallthru
      _
    // Predicated region
    $region6: #{mlp_forward.1} parent=1 // pred_check
      _
    $region7: #{mlp_forward.1} parent=1 // pred_check_branch
      %27 = sbr.rel (0) target = $region9
    $region8: #{mlp_forward.1} parent=1 // pred_region
      %s29 = ssub.s32 1024, 1024
      %30 = vsyncadd [#allocation6], %s29
      %s31 = sshll.u32 [#allocation5], 4
      %s32 = int_to_ptr.vmem [resolvable:$true] %s31
      %37 = dma.hbm_to_vmem [thread:$0]  %s1, 1024, %s32, [#allocation6], 128, 128, 8
    $region9: #{mlp_forward.1} parent=1 // pred_fallthru
      _
    // Predicated region
    $region10: #{mlp_forward.1} parent=1 // pred_check
      _
    $region11: #{mlp_forward.1} parent=1 // pred_check_branch
      %39 = sbr.rel (0) target = $region13
    $region12: #{mlp_forward.1} parent=1 // pred_region
      %s41 = ssub.s32 32, 32
      %42 = vsyncadd [#allocation6], %s41
      %s44 = sshll.u32 [#allocation7], 4
      %s45 = int_to_ptr.vmem [resolvable:$true] %s44
      %47 = dma.hbm_to_vmem [thread:$0]  %s2, 32, %s45, [#allocation6]
    $region13: #{mlp_forward.1} parent=1 // pred_fallthru
      _
    // Predicated region
    $region14: #{mlp_forward.1} parent=1 // pred_check
      _
    $region15: #{mlp_forward.1} parent=1 // pred_check_branch
      %49 = sbr.rel (0) target = $region17
    $region16: #{mlp_forward.1} parent=1 // pred_region
      %s51 = ssub.s32 2048, 2048
      %52 = vsyncadd [#allocation9], %s51
      %s53 = sshll.u32 [#allocation8], 4
      %s54 = int_to_ptr.vmem [resolvable:$true] %s53
      %59 = dma.hbm_to_vmem [thread:$0]  %s3, 2048, %s54, [#allocation9], 64, 64, 4
    $region17: #{mlp_forward.1} parent=1 // pred_fallthru
      _
    // Predicated region
    $region18: #{mlp_forward.1} parent=1 // pred_check
      _
    $region19: #{mlp_forward.1} parent=1 // pred_check_branch
      %61 = sbr.rel (0) target = $region21
    $region20: #{mlp_forward.1} parent=1 // pred_region
      %s63 = ssub.s32 16, 16
      %64 = vsyncadd [#allocation9], %s63
      %s66 = sshll.u32 [#allocation10], 4
      %s67 = int_to_ptr.vmem [resolvable:$true] %s66
      %69 = dma.hbm_to_vmem [thread:$0]  %s4, 16, %s67, [#allocation9]
    $region21: #{mlp_forward.1} parent=1 // pred_fallthru
      _
    // Predicated region
    $region22: #{mlp_forward.1} parent=1 // pred_check
      _
    $region23: #{mlp_forward.1} parent=1 // pred_check_branch
      %71 = sbr.rel (0) target = $region25
    $region24: #{mlp_forward.1} parent=1 // pred_region
      %72 = dma.done [#allocation3], 1024
    $region25: #{mlp_forward.1} parent=1 // pred_fallthru
      _
    // Predicated region
    $region26: #{mlp_forward.1} parent=1 // pred_check
      _
    $region27: #{mlp_forward.1} parent=1 // pred_check_branch
      %74 = sbr.rel (0) target = $region29
    $region28: #{mlp_forward.1} parent=1 // pred_region
      %75 = dma.done [#allocation6], 1024
    $region29: #{mlp_forward.1} parent=1 // pred_fallthru
      _
    // Predicated region
    $region30: #{mlp_forward.1} parent=1 // pred_check
      _
    $region31: #{mlp_forward.1} parent=1 // pred_check_branch
      %77 = sbr.rel (0) target = $region33
    $region32: #{mlp_forward.1} parent=1 // pred_region
      %78 = dma.done [#allocation6], 32
    $region33: #{mlp_forward.1} parent=1 // pred_fallthru
      _
    // Predicated region
    $region34: #{mlp_forward.1} parent=1 // pred_check
      _
    $region35: #{mlp_forward.1} parent=1 // pred_check_branch
      %80 = sbr.rel (0) target = $region37
    $region36: #{mlp_forward.1} parent=1 // pred_region
      %81 = dma.done [#allocation9], 2048
    $region37: #{mlp_forward.1} parent=1 // pred_fallthru
      _
    // Predicated region
    $region38: #{mlp_forward.1} parent=1 // pred_check
      _
    $region39: #{mlp_forward.1} parent=1 // pred_check_branch
      %83 = sbr.rel (0) target = $region41
    $region40: #{mlp_forward.1} parent=1 // pred_region
      %84 = dma.done [#allocation9], 16
    $region41: #{mlp_forward.1} parent=1 // pred_fallthru
      _
    %v86 = vld [vmem:[#allocation2] sm:$0xf]
    %v87 = vld [vmem:[#allocation2 + $0x4] sm:$0xf]
    %v88 = vld [vmem:[#allocation2 + $0x8] sm:$0xf]
    %v89 = vld [vmem:[#allocation2 + $0xc] sm:$0xf]
    %v90 = vld [vmem:[#allocation2 + $0x10] sm:$0xf]
    %v91 = vld [vmem:[#allocation2 + $0x14] sm:$0xf]
    %v92 = vld [vmem:[#allocation2 + $0x18] sm:$0xf]
    %v93 = vld [vmem:[#allocation2 + $0x1c] sm:$0xf]
    %v94 = vld [vmem:[#allocation2 + $0x20] sm:$0xf]
    %v95 = vld [vmem:[#allocation2 + $0x24] sm:$0xf]
    %v96 = vld [vmem:[#allocation2 + $0x28] sm:$0xf]
    %v97 = vld [vmem:[#allocation2 + $0x2c] sm:$0xf]
    %v98 = vld [vmem:[#allocation2 + $0x30] sm:$0xf]
    %v99 = vld [vmem:[#allocation2 + $0x34] sm:$0xf]
    %v100 = vld [vmem:[#allocation2 + $0x38] sm:$0xf]
    %v101 = vld [vmem:[#allocation2 + $0x3c] sm:$0xf]
    %v102 = vld [vmem:[#allocation5] sm:$0xff]
    %v103 = vld [vmem:[#allocation5 + $0x8] sm:$0xff]
    %v104 = vld [vmem:[#allocation5 + $0x10] sm:$0xff]
    %v105 = vld [vmem:[#allocation5 + $0x18] sm:$0xff]
    %v106 = vld [vmem:[#allocation5 + $0x20] sm:$0xff]
    %v107 = vld [vmem:[#allocation5 + $0x28] sm:$0xff]
    %v108 = vld [vmem:[#allocation5 + $0x30] sm:$0xff]
    %v109 = vld [vmem:[#allocation5 + $0x38] sm:$0xff]
    %v110 = vld [vmem:[#allocation7] sm:$0x3]
    %v112 = vlaneseq
    %v113 = vshrl.u32 %v112, 7
    %v114 = vsub.s32 0, %v113
    %v115 = vrot.slane %v110, %v114
    %v116 = vlaneseq
    %v117 = vshrl.u32 %v116, 7
    %v118 = vsub.s32 1, %v117
    %v119 = vrot.slane %v110, %v118
    %v138 = vunpack.c.l.b16 %v86
    %v139 = vunpack.c.l.b16 %v87
    %v140 = vunpack.c.l.b16 %v88
    %v141 = vunpack.c.l.b16 %v89
    %v142 = vunpack.c.l.b16 %v90
    %v143 = vunpack.c.l.b16 %v91
    %v144 = vunpack.c.l.b16 %v92
    %v145 = vunpack.c.l.b16 %v93
    %v146 = vunpack.c.l.b16 %v94
    %v147 = vunpack.c.l.b16 %v95
    %v148 = vunpack.c.l.b16 %v96
    %v149 = vunpack.c.l.b16 %v97
    %v150 = vunpack.c.l.b16 %v98
    %v151 = vunpack.c.l.b16 %v99
    %v152 = vunpack.c.l.b16 %v100
    %v153 = vunpack.c.l.b16 %v101
    %v154 = vpack.c.b16 %v139, %v138
    %v155 = vpack.c.b16 %v141, %v140
    %v156 = vpack.c.b16 %v143, %v142
    %v157 = vpack.c.b16 %v145, %v144
    %v158 = vpack.c.b16 %v147, %v146
    %v159 = vpack.c.b16 %v149, %v148
    %v160 = vpack.c.b16 %v151, %v150
    %v161 = vpack.c.b16 %v153, %v152
    %v170 = vunpack.c.l.b16 %v102
    %v171 = vunpack.c.h.b16 %v102
    %v172 = vunpack.c.l.b16 %v103
    %v173 = vunpack.c.h.b16 %v103
    %v174 = vunpack.c.l.b16 %v104
    %v175 = vunpack.c.h.b16 %v104
    %v176 = vunpack.c.l.b16 %v105
    %v177 = vunpack.c.h.b16 %v105
    %v178 = vunpack.c.l.b16 %v106
    %v179 = vunpack.c.h.b16 %v106
    %v180 = vunpack.c.l.b16 %v107
    %v181 = vunpack.c.h.b16 %v107
    %v182 = vunpack.c.l.b16 %v108
    %v183 = vunpack.c.h.b16 %v108
    %v184 = vunpack.c.l.b16 %v109
    %v185 = vunpack.c.h.b16 %v109
    %v186 = vpack.c.b16 %v172, %v170
    %v187 = vpack.c.b16 %v173, %v171
    %v188 = vpack.c.b16 %v176, %v174
    %v189 = vpack.c.b16 %v177, %v175
    %v190 = vpack.c.b16 %v180, %v178
    %v191 = vpack.c.b16 %v181, %v179
    %v192 = vpack.c.b16 %v184, %v182
    %v193 = vpack.c.b16 %v185, %v183
    %vm202 = vcmask 523264
    %v204 = vsel %vm202, %v154, 0
    %v207 = vsel %vm202, %v155, 0
    %v210 = vsel %vm202, %v156, 0
    %v213 = vsel %vm202, %v157, 0
    %v216 = vsel %vm202, %v158, 0
    %v219 = vsel %vm202, %v159, 0
    %v222 = vsel %vm202, %v160, 0
    %v225 = vsel %vm202, %v161, 0
    %227 = vmatprep.subr.bf16.mxu0 %v187
    %228 = vmatpush1.bf16.msra.mxu0 %v186
    %229 = vmatprep.subr.bf16.mxu0 %v189
    %230 = vmatpush1.bf16.msra.mxu0 %v188
    %231 = vmatprep.subr.bf16.mxu0 %v191
    %232 = vmatpush1.bf16.msra.mxu0 %v190
    %233 = vmatprep.subr.bf16.mxu0 %v193
    %234 = vmatpush1.bf16.msra.mxu0 %v192
    %235 = vmatprep.subr.bf16.mxu0 0
    %236 = vmatpush1.bf16.msra.mxu0 0
    %237 = vmatprep.subr.bf16.mxu0 0
    %238 = vmatpush1.bf16.msra.mxu0 0
    %239 = vmatprep.subr.bf16.mxu0 0
    %240 = vmatpush1.bf16.msra.mxu0 0
    %241 = vmatprep.subr.bf16.mxu0 0
    %242 = vmatpush1.bf16.msra.mxu0 0
    %243 = vmatprep.subr.bf16.mxu0 0
    %244 = vmatpush1.bf16.msra.mxu0 0
    %245 = vmatprep.subr.bf16.mxu0 0
    %246 = vmatpush1.bf16.msra.mxu0 0
    %247 = vmatprep.subr.bf16.mxu0 0
    %248 = vmatpush1.bf16.msra.mxu0 0
    %249 = vmatprep.subr.bf16.mxu0 0
    %250 = vmatpush1.bf16.msra.mxu0 0
    %251 = vmatprep.subr.bf16.mxu0 0
    %252 = vmatpush1.bf16.msra.mxu0 0
    %253 = vmatprep.subr.bf16.mxu0 0
    %254 = vmatpush1.bf16.msra.mxu0 0
    %255 = vmatprep.subr.bf16.mxu0 0
    %256 = vmatpush1.bf16.msra.mxu0 0
    %257 = vmatprep.subr.bf16.mxu0 0
    %258 = vmatpush1.bf16.msra.mxu0 0
    %259 = vmatprep.mubr.bf16.mxu0 0
    %260 = vmatmul.mubr.bf16.gmra.mrb[0].mxu0 %v204
    %v261 = vpop.f32.mrb[0].mxu0
    %v262 = vadd.f32 %v115, %v261
    %v263 = vpop.f32.mrb[0].mxu0
    %v264 = vadd.f32 %v119, %v263
    %v265 = vpop.f32.mrb[0].mxu0
    %v266 = vadd.f32 %v115, %v265
    %v267 = vpop.f32.mrb[0].mxu0
    %v268 = vadd.f32 %v119, %v267
    %269 = vmatprep.mubr.bf16.mxu0 0
    %270 = vmatmul.mubr.bf16.gmra.mrb[0].mxu0 %v207
    %v271 = vpop.f32.mrb[0].mxu0
    %v272 = vadd.f32 %v115, %v271
    %v273 = vpop.f32.mrb[0].mxu0
    %v274 = vadd.f32 %v119, %v273
    %v275 = vpop.f32.mrb[0].mxu0
    %v276 = vadd.f32 %v115, %v275
    %v277 = vpop.f32.mrb[0].mxu0
    %v278 = vadd.f32 %v119, %v277
    %279 = vmatprep.mubr.bf16.mxu0 0
    %280 = vmatmul.mubr.bf16.gmra.mrb[0].mxu0 %v210
    %v281 = vpop.f32.mrb[0].mxu0
    %v282 = vadd.f32 %v115, %v281
    %v283 = vpop.f32.mrb[0].mxu0
    %v284 = vadd.f32 %v119, %v283
    %v285 = vpop.f32.mrb[0].mxu0
    %v286 = vadd.f32 %v115, %v285
    %v287 = vpop.f32.mrb[0].mxu0
    %v288 = vadd.f32 %v119, %v287
    %289 = vmatprep.mubr.bf16.mxu0 0
    %290 = vmatmul.mubr.bf16.gmra.mrb[0].mxu0 %v213
    %v291 = vpop.f32.mrb[0].mxu0
    %v292 = vadd.f32 %v115, %v291
    %v293 = vpop.f32.mrb[0].mxu0
    %v294 = vadd.f32 %v119, %v293
    %v295 = vpop.f32.mrb[0].mxu0
    %v296 = vadd.f32 %v115, %v295
    %v297 = vpop.f32.mrb[0].mxu0
    %v298 = vadd.f32 %v119, %v297
    %299 = vmatprep.mubr.bf16.mxu0 0
    %300 = vmatmul.mubr.bf16.gmra.mrb[0].mxu0 %v216
    %v301 = vpop.f32.mrb[0].mxu0
    %v302 = vadd.f32 %v115, %v301
    %v303 = vpop.f32.mrb[0].mxu0
    %v304 = vadd.f32 %v119, %v303
    %v305 = vpop.f32.mrb[0].mxu0
    %v306 = vadd.f32 %v115, %v305
    %v307 = vpop.f32.mrb[0].mxu0
    %v308 = vadd.f32 %v119, %v307
    %309 = vmatprep.mubr.bf16.mxu0 0
    %310 = vmatmul.mubr.bf16.gmra.mrb[0].mxu0 %v219
    %v311 = vpop.f32.mrb[0].mxu0
    %v312 = vadd.f32 %v115, %v311
    %v313 = vpop.f32.mrb[0].mxu0
    %v314 = vadd.f32 %v119, %v313
    %v315 = vpop.f32.mrb[0].mxu0
    %v316 = vadd.f32 %v115, %v315
    %v317 = vpop.f32.mrb[0].mxu0
    %v318 = vadd.f32 %v119, %v317
    %319 = vmatprep.mubr.bf16.mxu0 0
    %320 = vmatmul.mubr.bf16.gmra.mrb[0].mxu0 %v222
    %v321 = vpop.f32.mrb[0].mxu0
    %v322 = vadd.f32 %v115, %v321
    %v323 = vpop.f32.mrb[0].mxu0
    %v324 = vadd.f32 %v119, %v323
    %v325 = vpop.f32.mrb[0].mxu0
    %v326 = vadd.f32 %v115, %v325
    %v327 = vpop.f32.mrb[0].mxu0
    %v328 = vadd.f32 %v119, %v327
    %329 = vmatprep.mubr.bf16.mxu0 0
    %330 = vmatmul.mubr.bf16.gmra.mrb[0].mxu0 %v225
    %v331 = vpop.f32.mrb[0].mxu0
    %v332 = vadd.f32 %v115, %v331
    %v333 = vpop.f32.mrb[0].mxu0
    %v334 = vadd.f32 %v119, %v333
    %v335 = vpop.f32.mrb[0].mxu0
    %v336 = vadd.f32 %v115, %v335
    %v337 = vpop.f32.mrb[0].mxu0
    %v338 = vadd.f32 %v119, %v337
    %339 = vdwg.mxu0
    %v340 = vmul.f32 %v262, 0.5
    %v341 = vmul.f32 %v264, 0.5
    %v342 = vmul.f32 %v266, 0.5
    %v343 = vmul.f32 %v268, 0.5
    %v344 = vmul.f32 %v272, 0.5
    %v345 = vmul.f32 %v274, 0.5
    %v346 = vmul.f32 %v276, 0.5
    %v347 = vmul.f32 %v278, 0.5
    %v348 = vmul.f32 %v282, 0.5
    %v349 = vmul.f32 %v284, 0.5
    %v350 = vmul.f32 %v286, 0.5
    %v351 = vmul.f32 %v288, 0.5
    %v352 = vmul.f32 %v292, 0.5
    %v353 = vmul.f32 %v294, 0.5
    %v354 = vmul.f32 %v296, 0.5
    %v355 = vmul.f32 %v298, 0.5
    %v356 = vmul.f32 %v302, 0.5
    %v357 = vmul.f32 %v304, 0.5
    %v358 = vmul.f32 %v306, 0.5
    %v359 = vmul.f32 %v308, 0.5
    %v360 = vmul.f32 %v312, 0.5
    %v361 = vmul.f32 %v314, 0.5
    %v362 = vmul.f32 %v316, 0.5
    %v363 = vmul.f32 %v318, 0.5
    %v364 = vmul.f32 %v322, 0.5
    %v365 = vmul.f32 %v324, 0.5
    %v366 = vmul.f32 %v326, 0.5
    %v367 = vmul.f32 %v328, 0.5
    %v368 = vmul.f32 %v332, 0.5
    %v369 = vmul.f32 %v334, 0.5
    %v370 = vmul.f32 %v336, 0.5
    %v371 = vmul.f32 %v338, 0.5
    %v372 = vmul.f32 %v262, 0.70710677
    %v373 = vmul.f32 %v264, 0.70710677
    %v374 = vmul.f32 %v266, 0.70710677
    %v375 = vmul.f32 %v268, 0.70710677
    %v376 = vmul.f32 %v272, 0.70710677
    %v377 = vmul.f32 %v274, 0.70710677
    %v378 = vmul.f32 %v276, 0.70710677
    %v379 = vmul.f32 %v278, 0.70710677
    %v380 = vmul.f32 %v282, 0.70710677
    %v381 = vmul.f32 %v284, 0.70710677
    %v382 = vmul.f32 %v286, 0.70710677
    %v383 = vmul.f32 %v288, 0.70710677
    %v384 = vmul.f32 %v292, 0.70710677
    %v385 = vmul.f32 %v294, 0.70710677
    %v386 = vmul.f32 %v296, 0.70710677
    %v387 = vmul.f32 %v298, 0.70710677
    %v388 = vmul.f32 %v302, 0.70710677
    %v389 = vmul.f32 %v304, 0.70710677
    %v390 = vmul.f32 %v306, 0.70710677
    %v391 = vmul.f32 %v308, 0.70710677
    %v392 = vmul.f32 %v312, 0.70710677
    %v393 = vmul.f32 %v314, 0.70710677
    %v394 = vmul.f32 %v316, 0.70710677
    %v395 = vmul.f32 %v318, 0.70710677
    %v396 = vmul.f32 %v322, 0.70710677
    %v397 = vmul.f32 %v324, 0.70710677
    %v398 = vmul.f32 %v326, 0.70710677
    %v399 = vmul.f32 %v328, 0.70710677
    %v400 = vmul.f32 %v332, 0.70710677
    %v401 = vmul.f32 %v334, 0.70710677
    %v402 = vmul.f32 %v336, 0.70710677
    %v403 = vmul.f32 %v338, 0.70710677
    %v404 = verf.f32.pop %v372
    %v405 = verf.f32.pop %v373
    %v406 = verf.f32.pop %v374
    %v407 = verf.f32.pop %v375
    %v408 = verf.f32.pop %v376
    %v409 = verf.f32.pop %v377
    %v410 = verf.f32.pop %v378
    %v411 = verf.f32.pop %v379
    %v412 = verf.f32.pop %v380
    %v413 = verf.f32.pop %v381
    %v414 = verf.f32.pop %v382
    %v415 = verf.f32.pop %v383
    %v416 = verf.f32.pop %v384
    %v417 = verf.f32.pop %v385
    %v418 = verf.f32.pop %v386
    %v419 = verf.f32.pop %v387
    %v420 = verf.f32.pop %v388
    %v421 = verf.f32.pop %v389
    %v422 = verf.f32.pop %v390
    %v423 = verf.f32.pop %v391
    %v424 = verf.f32.pop %v392
    %v425 = verf.f32.pop %v393
    %v426 = verf.f32.pop %v394
    %v427 = verf.f32.pop %v395
    %v428 = verf.f32.pop %v396
    %v429 = verf.f32.pop %v397
    %v430 = verf.f32.pop %v398
    %v431 = verf.f32.pop %v399
    %v432 = verf.f32.pop %v400
    %v433 = verf.f32.pop %v401
    %v434 = verf.f32.pop %v402
    %v435 = verf.f32.pop %v403
    %v436 = vadd.f32 %v404, 1.0
    %v437 = vadd.f32 %v405, 1.0
    %v438 = vadd.f32 %v406, 1.0
    %v439 = vadd.f32 %v407, 1.0
    %v440 = vadd.f32 %v408, 1.0
    %v441 = vadd.f32 %v409, 1.0
    %v442 = vadd.f32 %v410, 1.0
    %v443 = vadd.f32 %v411, 1.0
    %v444 = vadd.f32 %v412, 1.0
    %v445 = vadd.f32 %v413, 1.0
    %v446 = vadd.f32 %v414, 1.0
    %v447 = vadd.f32 %v415, 1.0
    %v448 = vadd.f32 %v416, 1.0
    %v449 = vadd.f32 %v417, 1.0
    %v450 = vadd.f32 %v418, 1.0
    %v451 = vadd.f32 %v419, 1.0
    %v452 = vadd.f32 %v420, 1.0
    %v453 = vadd.f32 %v421, 1.0
    %v454 = vadd.f32 %v422, 1.0
    %v455 = vadd.f32 %v423, 1.0
    %v456 = vadd.f32 %v424, 1.0
    %v457 = vadd.f32 %v425, 1.0
    %v458 = vadd.f32 %v426, 1.0
    %v459 = vadd.f32 %v427, 1.0
    %v460 = vadd.f32 %v428, 1.0
    %v461 = vadd.f32 %v429, 1.0
    %v462 = vadd.f32 %v430, 1.0
    %v463 = vadd.f32 %v431, 1.0
    %v464 = vadd.f32 %v432, 1.0
    %v465 = vadd.f32 %v433, 1.0
    %v466 = vadd.f32 %v434, 1.0
    %v467 = vadd.f32 %v435, 1.0
    %v468 = vmul.f32 %v340, %v436
    %v469 = vmul.f32 %v341, %v437
    %v470 = vmul.f32 %v342, %v438
    %v471 = vmul.f32 %v343, %v439
    %v472 = vmul.f32 %v344, %v440
    %v473 = vmul.f32 %v345, %v441
    %v474 = vmul.f32 %v346, %v442
    %v475 = vmul.f32 %v347, %v443
    %v476 = vmul.f32 %v348, %v444
    %v477 = vmul.f32 %v349, %v445
    %v478 = vmul.f32 %v350, %v446
    %v479 = vmul.f32 %v351, %v447
    %v480 = vmul.f32 %v352, %v448
    %v481 = vmul.f32 %v353, %v449
    %v482 = vmul.f32 %v354, %v450
    %v483 = vmul.f32 %v355, %v451
    %v484 = vmul.f32 %v356, %v452
    %v485 = vmul.f32 %v357, %v453
    %v486 = vmul.f32 %v358, %v454
    %v487 = vmul.f32 %v359, %v455
    %v488 = vmul.f32 %v360, %v456
    %v489 = vmul.f32 %v361, %v457
    %v490 = vmul.f32 %v362, %v458
    %v491 = vmul.f32 %v363, %v459
    %v492 = vmul.f32 %v364, %v460
    %v493 = vmul.f32 %v365, %v461
    %v494 = vmul.f32 %v366, %v462
    %v495 = vmul.f32 %v367, %v463
    %v496 = vmul.f32 %v368, %v464
    %v497 = vmul.f32 %v369, %v465
    %v498 = vmul.f32 %v370, %v466
    %v499 = vmul.f32 %v371, %v467
    %v500 = vpack.c.bf16 %v470, %v468
    %v501 = vpack.c.bf16 %v471, %v469
    %v502 = vpack.c.bf16 %v474, %v472
    %v503 = vpack.c.bf16 %v475, %v473
    %v504 = vpack.c.bf16 %v478, %v476
    %v505 = vpack.c.bf16 %v479, %v477
    %v506 = vpack.c.bf16 %v482, %v480
    %v507 = vpack.c.bf16 %v483, %v481
    %v508 = vpack.c.bf16 %v486, %v484
    %v509 = vpack.c.bf16 %v487, %v485
    %v510 = vpack.c.bf16 %v490, %v488
    %v511 = vpack.c.bf16 %v491, %v489
    %v512 = vpack.c.bf16 %v494, %v492
    %v513 = vpack.c.bf16 %v495, %v493
    %v514 = vpack.c.bf16 %v498, %v496
    %v515 = vpack.c.bf16 %v499, %v497
    %v516 = vld [vmem:[#allocation8] sm:$0xf]
    %v517 = vld [vmem:[#allocation8 + $0x4] sm:$0xf]
    %v518 = vld [vmem:[#allocation8 + $0x8] sm:$0xf]
    %v519 = vld [vmem:[#allocation8 + $0xc] sm:$0xf]
    %v520 = vld [vmem:[#allocation8 + $0x10] sm:$0xf]
    %v521 = vld [vmem:[#allocation8 + $0x14] sm:$0xf]
    %v522 = vld [vmem:[#allocation8 + $0x18] sm:$0xf]
    %v523 = vld [vmem:[#allocation8 + $0x1c] sm:$0xf]
    %v524 = vld [vmem:[#allocation8 + $0x20] sm:$0xf]
    %v525 = vld [vmem:[#allocation8 + $0x24] sm:$0xf]
    %v526 = vld [vmem:[#allocation8 + $0x28] sm:$0xf]
    %v527 = vld [vmem:[#allocation8 + $0x2c] sm:$0xf]
    %v528 = vld [vmem:[#allocation8 + $0x30] sm:$0xf]
    %v529 = vld [vmem:[#allocation8 + $0x34] sm:$0xf]
    %v530 = vld [vmem:[#allocation8 + $0x38] sm:$0xf]
    %v531 = vld [vmem:[#allocation8 + $0x3c] sm:$0xf]
    %v532 = vld [vmem:[#allocation8 + $0x40] sm:$0xf]
    %v533 = vld [vmem:[#allocation8 + $0x44] sm:$0xf]
    %v534 = vld [vmem:[#allocation8 + $0x48] sm:$0xf]
    %v535 = vld [vmem:[#allocation8 + $0x4c] sm:$0xf]
    %v536 = vld [vmem:[#allocation8 + $0x50] sm:$0xf]
    %v537 = vld [vmem:[#allocation8 + $0x54] sm:$0xf]
    %v538 = vld [vmem:[#allocation8 + $0x58] sm:$0xf]
    %v539 = vld [vmem:[#allocation8 + $0x5c] sm:$0xf]
    %v540 = vld [vmem:[#allocation8 + $0x60] sm:$0xf]
    %v541 = vld [vmem:[#allocation8 + $0x64] sm:$0xf]
    %v542 = vld [vmem:[#allocation8 + $0x68] sm:$0xf]
    %v543 = vld [vmem:[#allocation8 + $0x6c] sm:$0xf]
    %v544 = vld [vmem:[#allocation8 + $0x70] sm:$0xf]
    %v545 = vld [vmem:[#allocation8 + $0x74] sm:$0xf]
    %v546 = vld [vmem:[#allocation8 + $0x78] sm:$0xf]
    %v547 = vld [vmem:[#allocation8 + $0x7c] sm:$0xf]
    %v580 = vunpack.c.l.b16 %v516
    %v581 = vunpack.c.l.b16 %v517
    %v582 = vunpack.c.l.b16 %v518
    %v583 = vunpack.c.l.b16 %v519
    %v584 = vunpack.c.l.b16 %v520
    %v585 = vunpack.c.l.b16 %v521
    %v586 = vunpack.c.l.b16 %v522
    %v587 = vunpack.c.l.b16 %v523
    %v588 = vunpack.c.l.b16 %v524
    %v589 = vunpack.c.l.b16 %v525
    %v590 = vunpack.c.l.b16 %v526
    %v591 = vunpack.c.l.b16 %v527
    %v592 = vunpack.c.l.b16 %v528
    %v593 = vunpack.c.l.b16 %v529
    %v594 = vunpack.c.l.b16 %v530
    %v595 = vunpack.c.l.b16 %v531
    %v596 = vunpack.c.l.b16 %v532
    %v597 = vunpack.c.l.b16 %v533
    %v598 = vunpack.c.l.b16 %v534
    %v599 = vunpack.c.l.b16 %v535
    %v600 = vunpack.c.l.b16 %v536
    %v601 = vunpack.c.l.b16 %v537
    %v602 = vunpack.c.l.b16 %v538
    %v603 = vunpack.c.l.b16 %v539
    %v604 = vunpack.c.l.b16 %v540
    %v605 = vunpack.c.l.b16 %v541
    %v606 = vunpack.c.l.b16 %v542
    %v607 = vunpack.c.l.b16 %v543
    %v608 = vunpack.c.l.b16 %v544
    %v609 = vunpack.c.l.b16 %v545
    %v610 = vunpack.c.l.b16 %v546
    %v611 = vunpack.c.l.b16 %v547
    %v612 = vpack.c.b16 %v581, %v580
    %v613 = vpack.c.b16 %v583, %v582
    %v614 = vpack.c.b16 %v585, %v584
    %v615 = vpack.c.b16 %v587, %v586
    %v616 = vpack.c.b16 %v589, %v588
    %v617 = vpack.c.b16 %v591, %v590
    %v618 = vpack.c.b16 %v593, %v592
    %v619 = vpack.c.b16 %v595, %v594
    %v620 = vpack.c.b16 %v597, %v596
    %v621 = vpack.c.b16 %v599, %v598
    %v622 = vpack.c.b16 %v601, %v600
    %v623 = vpack.c.b16 %v603, %v602
    %v624 = vpack.c.b16 %v605, %v604
    %v625 = vpack.c.b16 %v607, %v606
    %v626 = vpack.c.b16 %v609, %v608
    %v627 = vpack.c.b16 %v611, %v610
    %644 = vmatprep.subr.bf16.mxu0 0
    %645 = vmatpush1.bf16.msra.mxu0 %v612
    %646 = vmatprep.subr.bf16.mxu0 0
    %647 = vmatpush1.bf16.msra.mxu0 %v613
    %648 = vmatprep.subr.bf16.mxu0 0
    %649 = vmatpush1.bf16.msra.mxu0 %v614
    %650 = vmatprep.subr.bf16.mxu0 0
    %651 = vmatpush1.bf16.msra.mxu0 %v615
    %652 = vmatprep.subr.bf16.mxu0 0
    %653 = vmatpush1.bf16.msra.mxu0 %v616
    %654 = vmatprep.subr.bf16.mxu0 0
    %655 = vmatpush1.bf16.msra.mxu0 %v617
    %656 = vmatprep.subr.bf16.mxu0 0
    %657 = vmatpush1.bf16.msra.mxu0 %v618
    %658 = vmatprep.subr.bf16.mxu0 0
    %659 = vmatpush1.bf16.msra.mxu0 %v619
    %660 = vmatprep.subr.bf16.mxu0 0
    %661 = vmatpush1.bf16.msra.mxu0 %v620
    %662 = vmatprep.subr.bf16.mxu0 0
    %663 = vmatpush1.bf16.msra.mxu0 %v621
    %664 = vmatprep.subr.bf16.mxu0 0
    %665 = vmatpush1.bf16.msra.mxu0 %v622
    %666 = vmatprep.subr.bf16.mxu0 0
    %667 = vmatpush1.bf16.msra.mxu0 %v623
    %668 = vmatprep.subr.bf16.mxu0 0
    %669 = vmatpush1.bf16.msra.mxu0 %v624
    %670 = vmatprep.subr.bf16.mxu0 0
    %671 = vmatpush1.bf16.msra.mxu0 %v625
    %672 = vmatprep.subr.bf16.mxu0 0
    %673 = vmatpush1.bf16.msra.mxu0 %v626
    %674 = vmatprep.subr.bf16.mxu0 0
    %675 = vmatpush1.bf16.msra.mxu0 %v627
    %676 = vmatprep.mubr.bf16.mxu0 %v501
    %677 = vmatmul.mubr.bf16.gmra.mrb[0].mxu0 %v500
    %v678 = vpop.f32.mrb[0].mxu0
    %v679 = vadd.f32 0.0, %v678
    %v680 = vpop.f32.mrb[0].mxu0
    %v681 = vpop.f32.mrb[0].mxu0
    %v682 = vadd.f32 0.0, %v681
    %v683 = vpop.f32.mrb[0].mxu0
    %684 = vmatprep.mubr.bf16.mxu0 %v503
    %685 = vmatmul.mubr.bf16.gmra.mrb[0].mxu0 %v502
    %v686 = vpop.f32.mrb[0].mxu0
    %v687 = vadd.f32 0.0, %v686
    %v688 = vpop.f32.mrb[0].mxu0
    %v689 = vpop.f32.mrb[0].mxu0
    %v690 = vadd.f32 0.0, %v689
    %v691 = vpop.f32.mrb[0].mxu0
    %692 = vmatprep.mubr.bf16.mxu0 %v505
    %693 = vmatmul.mubr.bf16.gmra.mrb[0].mxu0 %v504
    %v694 = vpop.f32.mrb[0].mxu0
    %v695 = vadd.f32 0.0, %v694
    %v696 = vpop.f32.mrb[0].mxu0
    %v697 = vpop.f32.mrb[0].mxu0
    %v698 = vadd.f32 0.0, %v697
    %v699 = vpop.f32.mrb[0].mxu0
    %700 = vmatprep.mubr.bf16.mxu0 %v507
    %701 = vmatmul.mubr.bf16.gmra.mrb[0].mxu0 %v506
    %v702 = vpop.f32.mrb[0].mxu0
    %v703 = vadd.f32 0.0, %v702
    %v704 = vpop.f32.mrb[0].mxu0
    %v705 = vpop.f32.mrb[0].mxu0
    %v706 = vadd.f32 0.0, %v705
    %v707 = vpop.f32.mrb[0].mxu0
    %708 = vmatprep.mubr.bf16.mxu0 %v509
    %709 = vmatmul.mubr.bf16.gmra.mrb[0].mxu0 %v508
    %v710 = vpop.f32.mrb[0].mxu0
    %v711 = vadd.f32 0.0, %v710
    %v712 = vpop.f32.mrb[0].mxu0
    %v713 = vpop.f32.mrb[0].mxu0
    %v714 = vadd.f32 0.0, %v713
    %v715 = vpop.f32.mrb[0].mxu0
    %716 = vmatprep.mubr.bf16.mxu0 %v511
    %717 = vmatmul.mubr.bf16.gmra.mrb[0].mxu0 %v510
    %v718 = vpop.f32.mrb[0].mxu0
    %v719 = vadd.f32 0.0, %v718
    %v720 = vpop.f32.mrb[0].mxu0
    %v721 = vpop.f32.mrb[0].mxu0
    %v722 = vadd.f32 0.0, %v721
    %v723 = vpop.f32.mrb[0].mxu0
    %724 = vmatprep.mubr.bf16.mxu0 %v513
    %725 = vmatmul.mubr.bf16.gmra.mrb[0].mxu0 %v512
    %v726 = vpop.f32.mrb[0].mxu0
    %v727 = vadd.f32 0.0, %v726
    %v728 = vpop.f32.mrb[0].mxu0
    %v729 = vpop.f32.mrb[0].mxu0
    %v730 = vadd.f32 0.0, %v729
    %v731 = vpop.f32.mrb[0].mxu0
    %732 = vmatprep.mubr.bf16.mxu0 %v515
    %733 = vmatmul.mubr.bf16.gmra.mrb[0].mxu0 %v514
    %v734 = vpop.f32.mrb[0].mxu0
    %v735 = vadd.f32 0.0, %v734
    %v736 = vpop.f32.mrb[0].mxu0
    %v737 = vpop.f32.mrb[0].mxu0
    %v738 = vadd.f32 0.0, %v737
    %v739 = vpop.f32.mrb[0].mxu0
    %740 = vdwg.mxu0
    %p741 = scmp.eq.s32.totalorder 0, 0
    // Predicated region
    $region42: #{mlp_forward.1} parent=1 // pred_check
      %p742 = pneg %p741
    $region43: #{mlp_forward.1} parent=1 // pred_check_branch
      %744 = sbr.rel (%p742) target = $region45
    $region44: #{mlp_forward.1} parent=1 // pred_region
      %v745 = vld [vmem:[#allocation10] sm:$0x1]
      %v747 = vlaneseq
      %v748 = vshrl.u32 %v747, 7
      %v749 = vsub.s32 0, %v748
      %v750 = vrot.slane %v745, %v749
      %v752 = vadd.f32 %v679, %v750
      %v753 = vadd.f32 %v682, %v750
      %v754 = vadd.f32 %v687, %v750
      %v755 = vadd.f32 %v690, %v750
      %v756 = vadd.f32 %v695, %v750
      %v757 = vadd.f32 %v698, %v750
      %v758 = vadd.f32 %v703, %v750
      %v759 = vadd.f32 %v706, %v750
      %v760 = vadd.f32 %v711, %v750
      %v761 = vadd.f32 %v714, %v750
      %v762 = vadd.f32 %v719, %v750
      %v763 = vadd.f32 %v722, %v750
      %v764 = vadd.f32 %v727, %v750
      %v765 = vadd.f32 %v730, %v750
      %v766 = vadd.f32 %v735, %v750
      %v767 = vadd.f32 %v738, %v750
      %768 = vst.msk [vmem:[#allocation11] sm:$0xff] %vm202, %v752
      %769 = vst.msk [vmem:[#allocation11 + $0x8] sm:$0xff] %vm202, %v753
      %770 = vst.msk [vmem:[#allocation11 + $0x10] sm:$0xff] %vm202, %v754
      %771 = vst.msk [vmem:[#allocation11 + $0x18] sm:$0xff] %vm202, %v755
      %772 = vst.msk [vmem:[#allocation11 + $0x20] sm:$0xff] %vm202, %v756
      %773 = vst.msk [vmem:[#allocation11 + $0x28] sm:$0xff] %vm202, %v757
      %774 = vst.msk [vmem:[#allocation11 + $0x30] sm:$0xff] %vm202, %v758
      %775 = vst.msk [vmem:[#allocation11 + $0x38] sm:$0xff] %vm202, %v759
      %776 = vst.msk [vmem:[#allocation11 + $0x40] sm:$0xff] %vm202, %v760
      %777 = vst.msk [vmem:[#allocation11 + $0x48] sm:$0xff] %vm202, %v761
      %778 = vst.msk [vmem:[#allocation11 + $0x50] sm:$0xff] %vm202, %v762
      %779 = vst.msk [vmem:[#allocation11 + $0x58] sm:$0xff] %vm202, %v763
      %780 = vst.msk [vmem:[#allocation11 + $0x60] sm:$0xff] %vm202, %v764
      %781 = vst.msk [vmem:[#allocation11 + $0x68] sm:$0xff] %vm202, %v765
      %782 = vst.msk [vmem:[#allocation11 + $0x70] sm:$0xff] %vm202, %v766
      %783 = vst.msk [vmem:[#allocation11 + $0x78] sm:$0xff] %vm202, %v767
    $region45: #{mlp_forward.1} parent=1 // pred_fallthru
      _
    %p784 = scmp.gt.s32.totalorder 0, 0
    // Predicated region
    $region46: #{mlp_forward.1} parent=1 // pred_check
      %p785 = pneg %p784
    $region47: #{mlp_forward.1} parent=1 // pred_check_branch
      %787 = sbr.rel (%p785) target = $region49
    $region48: #{mlp_forward.1} parent=1 // pred_region
      %v788 = vld [vmem:[#allocation11] sm:$0xff]
      %v789 = vld [vmem:[#allocation11 + $0x8] sm:$0xff]
      %v790 = vld [vmem:[#allocation11 + $0x10] sm:$0xff]
      %v791 = vld [vmem:[#allocation11 + $0x18] sm:$0xff]
      %v792 = vld [vmem:[#allocation11 + $0x20] sm:$0xff]
      %v793 = vld [vmem:[#allocation11 + $0x28] sm:$0xff]
      %v794 = vld [vmem:[#allocation11 + $0x30] sm:$0xff]
      %v795 = vld [vmem:[#allocation11 + $0x38] sm:$0xff]
      %v796 = vld [vmem:[#allocation11 + $0x40] sm:$0xff]
      %v797 = vld [vmem:[#allocation11 + $0x48] sm:$0xff]
      %v798 = vld [vmem:[#allocation11 + $0x50] sm:$0xff]
      %v799 = vld [vmem:[#allocation11 + $0x58] sm:$0xff]
      %v800 = vld [vmem:[#allocation11 + $0x60] sm:$0xff]
      %v801 = vld [vmem:[#allocation11 + $0x68] sm:$0xff]
      %v802 = vld [vmem:[#allocation11 + $0x70] sm:$0xff]
      %v803 = vld [vmem:[#allocation11 + $0x78] sm:$0xff]
      %v804 = vadd.f32 %v788, %v679
      %v805 = vadd.f32 %v789, %v682
      %v806 = vadd.f32 %v790, %v687
      %v807 = vadd.f32 %v791, %v690
      %v808 = vadd.f32 %v792, %v695
      %v809 = vadd.f32 %v793, %v698
      %v810 = vadd.f32 %v794, %v703
      %v811 = vadd.f32 %v795, %v706
      %v812 = vadd.f32 %v796, %v711
      %v813 = vadd.f32 %v797, %v714
      %v814 = vadd.f32 %v798, %v719
      %v815 = vadd.f32 %v799, %v722
      %v816 = vadd.f32 %v800, %v727
      %v817 = vadd.f32 %v801, %v730
      %v818 = vadd.f32 %v802, %v735
      %v819 = vadd.f32 %v803, %v738
      %820 = vst.msk [vmem:[#allocation11] sm:$0xff] %vm202, %v804
      %821 = vst.msk [vmem:[#allocation11 + $0x8] sm:$0xff] %vm202, %v805
      %822 = vst.msk [vmem:[#allocation11 + $0x10] sm:$0xff] %vm202, %v806
      %823 = vst.msk [vmem:[#allocation11 + $0x18] sm:$0xff] %vm202, %v807
      %824 = vst.msk [vmem:[#allocation11 + $0x20] sm:$0xff] %vm202, %v808
      %825 = vst.msk [vmem:[#allocation11 + $0x28] sm:$0xff] %vm202, %v809
      %826 = vst.msk [vmem:[#allocation11 + $0x30] sm:$0xff] %vm202, %v810
      %827 = vst.msk [vmem:[#allocation11 + $0x38] sm:$0xff] %vm202, %v811
      %828 = vst.msk [vmem:[#allocation11 + $0x40] sm:$0xff] %vm202, %v812
      %829 = vst.msk [vmem:[#allocation11 + $0x48] sm:$0xff] %vm202, %v813
      %830 = vst.msk [vmem:[#allocation11 + $0x50] sm:$0xff] %vm202, %v814
      %831 = vst.msk [vmem:[#allocation11 + $0x58] sm:$0xff] %vm202, %v815
      %832 = vst.msk [vmem:[#allocation11 + $0x60] sm:$0xff] %vm202, %v816
      %833 = vst.msk [vmem:[#allocation11 + $0x68] sm:$0xff] %vm202, %v817
      %834 = vst.msk [vmem:[#allocation11 + $0x70] sm:$0xff] %vm202, %v818
      %835 = vst.msk [vmem:[#allocation11 + $0x78] sm:$0xff] %vm202, %v819
    $region49: #{mlp_forward.1} parent=1 // pred_fallthru
      _
    // Predicated region
    $region50: #{mlp_forward.1} parent=1 // pred_check
      _
    $region51: #{mlp_forward.1} parent=1 // pred_check_branch
      %837 = sbr.rel (0) target = $region53
    $region52: #{mlp_forward.1} parent=1 // pred_region
      %s839 = ssub.s32 2048, 2048
      %840 = vsyncadd [#allocation4], %s839
      %s841 = sshll.u32 [#allocation11], 4
      %s842 = int_to_ptr.vmem [resolvable:$true] %s841
      %847 = dma.vmem_to_hbm [thread:$0]  %s842, 2048, %s5, [#allocation4], 128, 128, 8
    $region53: #{mlp_forward.1} parent=1 // pred_fallthru
      _
    // Predicated region
    $region54: #{mlp_forward.1} parent=1 // pred_check
      _
    $region55: #{mlp_forward.1} parent=1 // pred_check_branch
      %849 = sbr.rel (0) target = $region57
    $region56: #{mlp_forward.1} parent=1 // pred_region
      %850 = dma.done [#allocation4], 2048
    $region57: #{mlp_forward.1} parent=1 // pred_fallthru
      _
    %851 = vsyncpa [#allocation3], 1
    %852 = vsyncpa [#allocation6], 1
    %853 = vsyncpa [#allocation9], 1
    %854 = vsyncpa [#allocation4], 1

</llo_original>
